<compile_context>
chip_gen: v5e
topology: v5e:2x2
jax: 0.10.0
libtpu: 0.0.40
codegen_flags: <defaults>
</compile_context>

<pallas_src>
import jax
import jax.numpy as jnp
from jax.experimental import pallas as pl
from jax.experimental.pallas import tpu as pltpu

SLAB_W = 1024          # lane width of the flattened slab (8 vregs wide)
MAX_BLOCK_ROWS = 256   # (256, 1024) f32 = 1 MiB per buffer


def _nonsym_quant_kernel(params_ref, x_ref, o_ref):
    # params_ref: SMEM (3,) f32 = [lower, upper, scale], precomputed in wrapper.
    lower = params_ref[0]
    upper = params_ref[1]
    scale = params_ref[2]

    x = x_ref[...].astype(jnp.float32)           # f32 compute even for bf16 I/O
    clamped = jnp.clip(x, lower, upper)
    quant = jnp.round((clamped - lower) / scale)  # divide (not 1/scale) for parity
    o_ref[...] = (scale * quant + lower).astype(o_ref.dtype)


def nonsymmetric_quantizer_u(x, lower, length, *, bits=8):
    """Fake-quantize `x` (any shape) with scalar params lower/length."""
    orig_shape = x.shape
    dtype = x.dtype

    flat = x.reshape(-1)
    n = flat.shape[0]

    # Pad only to a multiple of the slab width (at most SLAB_W - 1 elements).
    n_pad = pl.cdiv(n, SLAB_W) * SLAB_W
    if n_pad != n:
        flat = jnp.pad(flat, (0, n_pad - n))
    slab = flat.reshape(-1, SLAB_W)
    rows = slab.shape[0]

    # Tile rows: 1 MiB blocks for large inputs; for small inputs a single block
    # covering the full row extent (block dim == array dim satisfies the
    # (8,128) / (16,128) tiling rule).
    block_rows = MAX_BLOCK_ROWS if rows >= MAX_BLOCK_ROWS else rows
    grid = (pl.cdiv(rows, block_rows),)

    # Scalar quantization parameters, computed once outside the kernel.
    lower_s = jnp.asarray(lower, jnp.float32).reshape(())
    length_s = jnp.abs(jnp.asarray(length, jnp.float32).reshape(()))
    upper_s = lower_s + length_s
    scale_s = length_s / (2.0 ** bits - 1.0)
    params = jnp.stack([lower_s, upper_s, scale_s])   # (3,)

    out_slab = pl.pallas_call(
        _nonsym_quant_kernel,
        out_shape=jax.ShapeDtypeStruct((rows, SLAB_W), dtype),
        grid_spec=pltpu.PrefetchScalarGridSpec(
            num_scalar_prefetch=0,
            grid=grid,
            in_specs=[
                pl.BlockSpec(memory_space=pltpu.MemorySpace.SMEM),   # params (3,)
                pl.BlockSpec((block_rows, SLAB_W), lambda i: (i, 0)),  # x tile
            ],
            out_specs=pl.BlockSpec((block_rows, SLAB_W), lambda i: (i, 0)),
        ),
        compiler_params=pltpu.CompilerParams(
            dimension_semantics=("parallel",)),
    )(params, slab)

    out_flat = out_slab.reshape(-1)
    if n_pad != n:
        out_flat = out_flat[:n]
    return out_flat.reshape(orig_shape)


def _reference(x, lower, length, bits=8):
    length = jnp.abs(length)
    upper = lower + length
    scale = length / (2.0 ** bits - 1.0)
    clamp = (jnp.clip(x, lower, upper) - lower) / scale
    quant = jnp.round(clamp)
    return scale * quant + lower


if __name__ == "__main__":
    key = jax.random.PRNGKey(0)

    # Input consistent with a conv activation: NCHW [2, 4, 16, 16].
    x = jax.random.normal(key, (2, 4, 16, 16), dtype=jnp.float32)

    # Parameter init matching nn.Parameter defaults in __init__:
    # lower = zeros((1,)), length = ones((1,)), bits = 8.
    lower = jnp.zeros((1,), jnp.float32)
    length = jnp.ones((1,), jnp.float32)
    bits = 8

    out = nonsymmetric_quantizer_u(x, lower, length, bits=bits)
    out = jax.block_until_ready(out)

    ref = _reference(x, lower[0], length[0], bits=bits)
    assert out.shape == x.shape and out.dtype == x.dtype
    assert jnp.allclose(out, ref, atol=1e-6, rtol=1e-6), "mismatch vs reference"

    print("KERNEL_OK")
</pallas_src>

<mosaic_0001>
module attributes {stable_mosaic.version = 11 : i64} {
  func.func @_nonsym_quant_kernel(%arg0: i32, %arg1: memref<3xf32, #tpu.memory_space<smem>>, %arg2: memref<2x1024xf32, #tpu.memory_space<vmem>>, %arg3: memref<2x1024xf32, #tpu.memory_space<vmem>>) attributes {dimension_semantics = [#tpu.dimension_semantics<parallel>], iteration_bounds = array<i64: 1>, scalar_prefetch = 0 : i64, scratch_operands = 0 : i64, tpu.core_type = #tpu.core_type<tc>, window_params = [{transform_indices = @transform_0, window_bounds = array<i64: 3>}, {transform_indices = @transform_1, window_bounds = array<i64: 2, 1024>}, {transform_indices = @transform_2, window_bounds = array<i64: 2, 1024>}]} {
    %c0 = arith.constant 0 : index
    %0 = memref.load %arg1[%c0] : memref<3xf32, #tpu.memory_space<smem>>
    %c1 = arith.constant 1 : index
    %1 = memref.load %arg1[%c1] : memref<3xf32, #tpu.memory_space<smem>>
    %c2 = arith.constant 2 : index
    %2 = memref.load %arg1[%c2] : memref<3xf32, #tpu.memory_space<smem>>
    %c0_0 = arith.constant 0 : index
    %c0_1 = arith.constant 0 : index
    %3 = vector.load %arg2[%c0_0, %c0_1] : memref<2x1024xf32, #tpu.memory_space<vmem>>, vector<2x1024xf32>
    %4 = vector.broadcast %0 : f32 to vector<2x1024xf32>
    %5 = arith.maximumf %4, %3 : vector<2x1024xf32>
    %6 = vector.broadcast %1 : f32 to vector<2x1024xf32>
    %7 = arith.minimumf %6, %5 : vector<2x1024xf32>
    %8 = vector.broadcast %0 : f32 to vector<2x1024xf32>
    %9 = arith.subf %7, %8 : vector<2x1024xf32>
    %10 = vector.broadcast %2 : f32 to vector<2x1024xf32>
    %11 = arith.divf %9, %10 : vector<2x1024xf32>
    %12 = math.roundeven %11 : vector<2x1024xf32>
    %13 = vector.broadcast %2 : f32 to vector<2x1024xf32>
    %14 = arith.mulf %13, %12 : vector<2x1024xf32>
    %15 = vector.broadcast %0 : f32 to vector<2x1024xf32>
    %16 = arith.addf %14, %15 : vector<2x1024xf32>
    %c0_2 = arith.constant 0 : index
    %c0_3 = arith.constant 0 : index
    %17 = vector.load %arg3[%c0_2, %c0_3] : memref<2x1024xf32, #tpu.memory_space<vmem>>, vector<2x1024xf32>
    tpu.vector_store %arg3[%c0_2, %c0_3], %16 {strides = array<i32>} : memref<2x1024xf32, #tpu.memory_space<vmem>>, vector<2x1024xf32>,
    return
  }
  func.func @transform_0(%arg0: i32) -> i32 {
    %c0_i32 = arith.constant 0 : i32
    %c0_i32_0 = arith.constant 0 : i32
    return %c0_i32 : i32
  }
  func.func @transform_1(%arg0: i32) -> (i32, i32) {
    %c0_i32 = arith.constant 0 : i32
    %c0_i32_0 = arith.constant 0 : i32
    return %arg0, %c0_i32 : i32, i32
  }
  func.func @transform_2(%arg0: i32) -> (i32, i32) {
    %c0_i32 = arith.constant 0 : i32
    %c0_i32_0 = arith.constant 0 : i32
    return %arg0, %c0_i32 : i32, i32
  }
}

</mosaic_0001>

<llo_original>
// kernel: tpu_custom_call.1
$region0: #{tpu_custom_call.1}
  #allocation0 [shape = 'u32[]', space=smem, size = 0x4, offset = 0x4, fixed_abs, tag = 'smem constant byte address 0x4 - core index']
  #allocation1 [shape = 'u32[72,128]{1,0:T(1,128)}', space=vmem, size = 0x9000, scoped, tag = 'internal scratch']
  %s0 = inlined_call_operand.hbm [shape: f32[3], index: 0, kind: input, shape index: {}]
  %s1 = inlined_call_operand.hbm [shape: f32[2,1024], index: 1, kind: input, shape index: {}]
  %s2 = inlined_call_operand.hbm [shape: f32[2,1024], index: 2, kind: output, shape index: {}]
  %s3 = sld [smem:[#allocation0]]
  $region26: #{tpu_custom_call.1} parent=0
    _
  %s5 = ssub.s32 1, %s3
  %s6 = scalar_select 0, %s5, %s3
  $region1: #{tpu_custom_call.1} parent=0
    #allocation2 [shape = 'u8[512]{0}', space=smem, size = 0x200, scoped, tag = 'input window, operand 0, single buffered']
    #allocation3 [shape = 's32[1]{0}', space=sflag, size = 0x4, scoped, tag = 'scoped memory for tpu_custom_call.1']
    #allocation4 [shape = 's32[1]{0}', space=sflag, size = 0x4, scoped, tag = 'scoped memory for tpu_custom_call.1']
    #allocation5 [shape = 's32[1]{0}', space=sflag, size = 0x4, scoped, tag = 'scoped memory for tpu_custom_call.1']
    #allocation6 [shape = 'u8[8192]{0}', space=vmem, size = 0x2000, scoped, tag = 'input window, operand 1, single buffered']
    #allocation7 [shape = 'u8[8192]{0}', space=vmem, size = 0x2000, scoped, tag = 'output window, operand 0, single buffered']
    %7 = vsyncpa [#allocation5], 0
    %8 = vsyncpa [#allocation3], 0
    %9 = vsyncpa [#allocation4], 0
    // Predicated region
    $region2: #{tpu_custom_call.1} parent=1 // pred_check
      _
    $region3: #{tpu_custom_call.1} parent=1 // pred_check_branch
      %11 = sbr.rel (0) target = $region5
    $region4: #{tpu_custom_call.1} parent=1 // pred_region
      %13 = vsyncadd [#allocation5], 0
      %s15 = sshll.u32 %s0, 4
      %s16 = int_to_ptr.hbm [resolvable:$true] %s15
      %18 = dma.hbm_to_smem %s16, 16, [#allocation2], [#allocation5]
    $region5: #{tpu_custom_call.1} parent=1 // pred_fallthru
      _
    // Predicated region
    $region6: #{tpu_custom_call.1} parent=1 // pred_check
      _
    $region7: #{tpu_custom_call.1} parent=1 // pred_check_branch
      %20 = sbr.rel (0) target = $region9
    $region8: #{tpu_custom_call.1} parent=1 // pred_region
      %22 = vsyncadd [#allocation3], 0
      %s24 = sshll.u32 %s1, 4
      %s25 = int_to_ptr.hbm [resolvable:$true] %s24
      %s26 = sshll.u32 [#allocation6], 4
      %s27 = int_to_ptr.vmem [resolvable:$true] %s26
      %29 = dma.hbm_to_vmem [thread:$0]  %s25, 256, %s27, [#allocation3]
    $region9: #{tpu_custom_call.1} parent=1 // pred_fallthru
      _
    // Predicated region
    $region10: #{tpu_custom_call.1} parent=1 // pred_check
      _
    $region11: #{tpu_custom_call.1} parent=1 // pred_check_branch
      %31 = sbr.rel (0) target = $region13
    $region12: #{tpu_custom_call.1} parent=1 // pred_region
      %33 = dma.done [#allocation5], 16
    $region13: #{tpu_custom_call.1} parent=1 // pred_fallthru
      _
    // Predicated region
    $region14: #{tpu_custom_call.1} parent=1 // pred_check
      _
    $region15: #{tpu_custom_call.1} parent=1 // pred_check_branch
      %35 = sbr.rel (0) target = $region17
    $region16: #{tpu_custom_call.1} parent=1 // pred_region
      %37 = dma.done [#allocation3], 256
    $region17: #{tpu_custom_call.1} parent=1 // pred_fallthru
      _
    %38 = sfence
    %s39 = sld [smem:[#allocation2]]
    %s40 = sld [smem:[#allocation2 + $0x1]]
    %s41 = sld [smem:[#allocation2 + $0x2]]
    %v42 = vld [vmem:[#allocation6] sm:$0xff]
    %v43 = vld [vmem:[#allocation6 + $0x8] sm:$0xff]
    %v44 = vstv %s39
    %v45 = vmax.f32 %v44, %v42
    %v46 = vmax.f32 %v44, %v43
    %v47 = vstv %s40
    %v48 = vmin.f32 %v47, %v45
    %v49 = vmin.f32 %v47, %v46
    %v50 = vsub.f32 %v48, %v44
    %v51 = vsub.f32 %v49, %v44
    %v52 = vstv %s41
    %v53 = vrcp.pop %v52
    %v54 = vmul.f32 %v52, %v53
    %v55 = vsub.f32 1.0, %v54
    %v56 = vmul.f32 %v53, %v55
    %v57 = vadd.f32 %v53, %v56
    %vm58 = vweird.f32 %v52
    %vm59 = vweird.f32 %v53
    %vm60 = vmor %vm58, %vm59
    %v61 = vsel %vm60, %v53, %v57
    %v62 = vand.u32 2147483647, %v52
    %vm63 = vcmp.eq.f32.partialorder %v62, 8.507059e+37
    %v64 = vand.u32 %v52, 2147483648
    %v65 = vor.u32 1.1754944e-38, %v64
    %v66 = vsel %vm63, %v65, %v61
    %v67 = vmul.f32 %v50, %v66
    %v68 = vmul.f32 %v51, %v66
    %v69 = vround.ne.pseudo %v67
    %v70 = vround.ne.pseudo %v68
    %v71 = vmul.f32 %v52, %v69
    %v72 = vmul.f32 %v52, %v70
    %v73 = vadd.f32 %v71, %v44
    %v74 = vadd.f32 %v72, %v44
    %75 = vst [vmem:[#allocation7] sm:$0xff] %v73
    %76 = vst [vmem:[#allocation7 + $0x8] sm:$0xff] %v74
    // Predicated region
    $region18: #{tpu_custom_call.1} parent=1 // pred_check
      _
    $region19: #{tpu_custom_call.1} parent=1 // pred_check_branch
      %78 = sbr.rel (0) target = $region21
    $region20: #{tpu_custom_call.1} parent=1 // pred_region
      %80 = vsyncadd [#allocation4], 0
      %s82 = sshll.u32 [#allocation7], 4
      %s83 = int_to_ptr.vmem [resolvable:$true] %s82
      %s84 = sshll.u32 %s2, 4
      %s85 = int_to_ptr.hbm [resolvable:$true] %s84
      %87 = dma.vmem_to_hbm [thread:$0]  %s83, 256, %s85, [#allocation4]
    $region21: #{tpu_custom_call.1} parent=1 // pred_fallthru
      _
    // Predicated region
    $region22: #{tpu_custom_call.1} parent=1 // pred_check
      _
    $region23: #{tpu_custom_call.1} parent=1 // pred_check_branch
      %89 = sbr.rel (0) target = $region25
    $region24: #{tpu_custom_call.1} parent=1 // pred_region
      %91 = dma.done [#allocation4], 256
    $region25: #{tpu_custom_call.1} parent=1 // pred_fallthru
      _
    %92 = vsyncpa [#allocation3], 1
    %93 = vsyncpa [#allocation4], 1
    %94 = vsyncpa [#allocation5], 1

</llo_original>
